<compile_context>
chip_gen: v5e
topology: v5e:2x2
jax: 0.10.0
libtpu: 0.0.40
codegen_flags: <defaults>
</compile_context>

<pallas_src>
import jax
import jax.numpy as jnp
import numpy as np
from jax.experimental import pallas as pl
from jax.experimental.pallas import tpu as pltpu

EPS = 1e-5   # BatchNorm1d default eps
K = 5        # ConvTranspose1d kernel size


# ----------------------------------------------------------------------------
# Pallas kernel: (ConvTranspose1d -> BN(batch stats) -> ReLU) x 2
# ----------------------------------------------------------------------------
def double_conv_kernel(x_ref, w1_ref, g1_ref, be1_ref, w2_ref, g2_ref, be2_ref,
                       out_ref):
    # x_ref  : (N, Cin_p, L)       NCL, length on the lane dim (lane-dense)
    # w1_ref : (Cmid_p, K*Cin_p)   im2col-ready weight (tap-flipped, chan-padded)
    # w2_ref : (Cout,   K*Cmid_p)
    # g*/be* : (C, 1)              BN affine (zero rows for padded channels)
    # out_ref: (N, Cout, L)
    N, cin_p, L = x_ref.shape
    cmid_p = w1_ref.shape[0]
    cout = w2_ref.shape[0]
    pad = K // 2
    inv_count = 1.0 / (N * L)

    w1 = w1_ref[...]
    w2 = w2_ref[...]
    zin = jnp.zeros((cin_p, pad), jnp.float32)
    zmid = jnp.zeros((cmid_p, pad), jnp.float32)

    # ---- ConvTranspose1d #1: one im2col MXU matmul per batch element ----------
    # (conv bias omitted: exact no-op under training-mode BN)
    acc1 = []
    s1 = jnp.zeros((cmid_p, 1), jnp.float32)
    ss1 = jnp.zeros((cmid_p, 1), jnp.float32)
    for n in range(N):
        xp = jnp.concatenate([zin, x_ref[n], zin], axis=1)                   # (Cin_p, L+4)
        slab = jnp.concatenate([xp[:, k:k + L] for k in range(K)], axis=0)   # (K*Cin_p, L)
        a = jnp.dot(w1, slab, preferred_element_type=jnp.float32)            # (Cmid_p, L)
        acc1.append(a)
        s1 = s1 + jnp.sum(a, axis=1, keepdims=True)      # single-pass BN stats
        ss1 = ss1 + jnp.sum(a * a, axis=1, keepdims=True)

    mean1 = s1 * inv_count
    var1 = ss1 * inv_count - mean1 * mean1               # biased var (train mode)
    scale1 = g1_ref[...] * jax.lax.rsqrt(var1 + EPS)
    shift1 = be1_ref[...] - scale1 * mean1

    # ---- ConvTranspose1d #2 ----------------------------------------------------
    acc2 = []
    s2 = jnp.zeros((cout, 1), jnp.float32)
    ss2 = jnp.zeros((cout, 1), jnp.float32)
    for n in range(N):
        h = jnp.maximum(scale1 * acc1[n] + shift1, 0.0)                      # BN1+ReLU
        hp = jnp.concatenate([zmid, h, zmid], axis=1)                        # (Cmid_p, L+4)
        slab = jnp.concatenate([hp[:, k:k + L] for k in range(K)], axis=0)   # (K*Cmid_p, L)
        a = jnp.dot(w2, slab, preferred_element_type=jnp.float32)            # (Cout, L)
        acc2.append(a)
        s2 = s2 + jnp.sum(a, axis=1, keepdims=True)
        ss2 = ss2 + jnp.sum(a * a, axis=1, keepdims=True)

    mean2 = s2 * inv_count
    var2 = ss2 * inv_count - mean2 * mean2
    scale2 = g2_ref[...] * jax.lax.rsqrt(var2 + EPS)
    shift2 = be2_ref[...] - scale2 * mean2

    # ---- BN2 + ReLU + lane-dense store -----------------------------------------
    for n in range(N):
        out_ref[n] = jnp.maximum(scale2 * acc2[n] + shift2, 0.0)


def double_conv_pallas(x_nclp, params):
    """x_nclp: (N, Cin_p, L) channel-padded NCL. Returns (N, Cout, L)."""
    w1, g1, be1, w2, g2, be2 = params
    N, cin_p, L = x_nclp.shape
    cout = w2.shape[0]

    def full(shape):
        return pl.BlockSpec(shape, lambda i, s=shape: (0,) * len(s))

    return pl.pallas_call(
        double_conv_kernel,
        out_shape=jax.ShapeDtypeStruct((N, cout, L), jnp.float32),
        grid=(1,),
        in_specs=[full(x_nclp.shape),
                  full(w1.shape), full(g1.shape), full(be1.shape),
                  full(w2.shape), full(g2.shape), full(be2.shape)],
        out_specs=full((N, cout, L)),
        compiler_params=pltpu.CompilerParams(
            dimension_semantics=("arbitrary",),
            vmem_limit_bytes=32 * 1024 * 1024),
    )(x_nclp, w1, g1, be1, w2, g2, be2)


# ----------------------------------------------------------------------------
# Parameter prep (layout + channel padding; conv biases intentionally dropped)
# ----------------------------------------------------------------------------
def _round_up(v, m):
    return -(-v // m) * m


def _to_kernel_w(w_iok, cin_pad):
    # PyTorch ConvTranspose1d weight (Cin, Cout, K); stride=1, pad=2 conv-
    # transpose == correlation with tap-flipped kernel and pad=2.
    cin, cout, k = w_iok.shape
    wf = jnp.flip(w_iok, axis=2)                           # tap flip
    w = jnp.transpose(wf, (1, 2, 0))                       # (Cout, K, Cin)
    w = jnp.pad(w, ((0, 0), (0, 0), (0, cin_pad - cin)))   # zero-pad in-channels
    return w.reshape(cout, k * cin_pad)                    # col index = k*cin_pad + c


def prepare_params(w1_t, g1, be1, w2_t, g2, be2):
    cin, cmid = w1_t.shape[0], w1_t.shape[1]
    cin_p = _round_up(cin, 8)
    cmid_p = _round_up(cmid, 8)
    w1 = jnp.pad(_to_kernel_w(w1_t, cin_p), ((0, cmid_p - cmid), (0, 0)))
    g1p = jnp.pad(g1, (0, cmid_p - cmid)).reshape(-1, 1)
    be1p = jnp.pad(be1, (0, cmid_p - cmid)).reshape(-1, 1)
    w2 = _to_kernel_w(w2_t, cmid_p)
    return cin_p, (w1, g1p, be1p, w2, g2.reshape(-1, 1), be2.reshape(-1, 1))


# ----------------------------------------------------------------------------
# Glue (plain JAX): upsample(linear, scale 5, align_corners) + F.pad + cat
# ----------------------------------------------------------------------------
def _upsample_pad_cat(x1, x2):
    # x1: (N, C1, L1), x2: (N, C2, L2)  — NCL like PyTorch
    N, C1, L1 = x1.shape
    _, C2, L2 = x2.shape
    Lo = 5 * L1
    if Lo > 1:
        src = jnp.arange(Lo, dtype=jnp.float32) * ((L1 - 1) / (Lo - 1))
    else:
        src = jnp.zeros((Lo,), jnp.float32)
    lo = jnp.floor(src).astype(jnp.int32)
    hi = jnp.minimum(lo + 1, L1 - 1)
    w = src - lo.astype(jnp.float32)
    x1u = x1[:, :, lo] * (1.0 - w) + x1[:, :, hi] * w          # (N, C1, Lo)

    diffY = C2 - x1u.shape[1]
    diffX = L2 - x1u.shape[2]
    x1p = jnp.pad(x1u, ((0, 0),
                        (diffY // 2, diffY - diffY // 2),
                        (diffX // 2, diffX - diffX // 2)))
    return jnp.concatenate([x2, x1p], axis=1)                  # (N, 2*C2, L2)


def up_forward(x1, x2, cin_p, params):
    x = _upsample_pad_cat(x1, x2)                   # (N, Cin, L)  NCL
    N, Cin, L = x.shape
    if cin_p > Cin:
        x = jnp.pad(x, ((0, 0), (0, cin_p - Cin), (0, 0)))   # align channels to 8
    return double_conv_pallas(x, params)            # (N, Cout, L)  NCL


# ----------------------------------------------------------------------------
# Pure-JAX reference (for correctness check only)
# ----------------------------------------------------------------------------
def _conv_t1d_ref(x_ncl, w_iok, b):
    # ConvTranspose1d(stride=1, padding=2) == correlation with flipped kernel, pad=2
    w_oik = jnp.transpose(jnp.flip(w_iok, axis=2), (1, 0, 2))
    y = jax.lax.conv_general_dilated(x_ncl, w_oik, (1,), [(K // 2, K // 2)],
                                     dimension_numbers=('NCH', 'OIH', 'NCH'))
    return y + b[None, :, None]


def _bn_relu_ref(x_ncl, g, be):
    mean = jnp.mean(x_ncl, axis=(0, 2), keepdims=True)
    var = jnp.mean((x_ncl - mean) ** 2, axis=(0, 2), keepdims=True)
    y = g[None, :, None] * (x_ncl - mean) * jax.lax.rsqrt(var + EPS) + be[None, :, None]
    return jnp.maximum(y, 0.0)


# ----------------------------------------------------------------------------
if __name__ == "__main__":
    key = jax.random.PRNGKey(0)
    N, C1, L1 = 2, 3, 8          # x1
    C2, L2 = 5, 42               # x2 (skip connection); 5*L1 = 40 -> diffX = 2
    in_ch = 2 * C2               # channels after pad + concat = 10
    out_ch = 6
    mid_ch = in_ch // 2          # 5

    ks = jax.random.split(key, 10)
    x1 = jax.random.normal(ks[0], (N, C1, L1), jnp.float32)
    x2 = jax.random.normal(ks[1], (N, C2, L2), jnp.float32)

    # ConvTranspose1d weights in PyTorch layout (in_ch, out_ch, K); BN affine params.
    # Conv biases b1/b2 are only used by the reference: under train-mode BN they
    # cancel exactly, so the kernel never consumes them.
    w1_t = 0.2 * jax.random.normal(ks[2], (in_ch, mid_ch, K), jnp.float32)
    b1 = 0.1 * jax.random.normal(ks[3], (mid_ch,), jnp.float32)
    g1 = 1.0 + 0.1 * jax.random.normal(ks[4], (mid_ch,), jnp.float32)
    be1 = 0.1 * jax.random.normal(ks[5], (mid_ch,), jnp.float32)
    w2_t = 0.2 * jax.random.normal(ks[6], (mid_ch, out_ch, K), jnp.float32)
    b2 = 0.1 * jax.random.normal(ks[7], (out_ch,), jnp.float32)
    g2 = 1.0 + 0.1 * jax.random.normal(ks[8], (out_ch,), jnp.float32)
    be2 = 0.1 * jax.random.normal(ks[9], (out_ch,), jnp.float32)

    cin_p, params = prepare_params(w1_t, g1, be1, w2_t, g2, be2)

    fwd = jax.jit(lambda a, b: up_forward(a, b, cin_p, params))
    y = jax.block_until_ready(fwd(x1, x2))
    assert y.shape == (N, out_ch, L2), y.shape

    # reference check
    xin = _upsample_pad_cat(x1, x2)
    h_ref = _bn_relu_ref(_conv_t1d_ref(xin, w1_t, b1), g1, be1)
    y_ref = _bn_relu_ref(_conv_t1d_ref(h_ref, w2_t, b2), g2, be2)
    np.testing.assert_allclose(np.asarray(y), np.asarray(y_ref), rtol=1e-3, atol=1e-3)

    print("KERNEL_OK")
</pallas_src>

<mosaic_0001>
module attributes {stable_mosaic.version = 11 : i64} {
  func.func @double_conv_kernel(%arg0: i32, %arg1: memref<2x16x42xf32, #tpu.memory_space<vmem>>, %arg2: memref<8x80xf32, #tpu.memory_space<vmem>>, %arg3: memref<8x1xf32, #tpu.memory_space<vmem>>, %arg4: memref<8x1xf32, #tpu.memory_space<vmem>>, %arg5: memref<6x40xf32, #tpu.memory_space<vmem>>, %arg6: memref<6x1xf32, #tpu.memory_space<vmem>>, %arg7: memref<6x1xf32, #tpu.memory_space<vmem>>, %arg8: memref<2x6x42xf32, #tpu.memory_space<vmem>>) attributes {dimension_semantics = [#tpu.dimension_semantics<arbitrary>], iteration_bounds = array<i64: 1>, scalar_prefetch = 0 : i64, scratch_operands = 0 : i64, tpu.core_type = #tpu.core_type<tc>, window_params = [{pipeline_mode = #tpu.pipeline_mode<synchronous>, transform_indices = @transform_0, window_bounds = array<i64: 2, 16, 42>}, {pipeline_mode = #tpu.pipeline_mode<synchronous>, transform_indices = @transform_1, window_bounds = array<i64: 8, 80>}, {pipeline_mode = #tpu.pipeline_mode<synchronous>, transform_indices = @transform_2, window_bounds = array<i64: 8, 1>}, {pipeline_mode = #tpu.pipeline_mode<synchronous>, transform_indices = @transform_3, window_bounds = array<i64: 8, 1>}, {pipeline_mode = #tpu.pipeline_mode<synchronous>, transform_indices = @transform_4, window_bounds = array<i64: 6, 40>}, {pipeline_mode = #tpu.pipeline_mode<synchronous>, transform_indices = @transform_5, window_bounds = array<i64: 6, 1>}, {pipeline_mode = #tpu.pipeline_mode<synchronous>, transform_indices = @transform_6, window_bounds = array<i64: 6, 1>}, {pipeline_mode = #tpu.pipeline_mode<synchronous>, transform_indices = @transform_7, window_bounds = array<i64: 2, 6, 42>}]} {
    %c0 = arith.constant 0 : index
    %c0_0 = arith.constant 0 : index
    %0 = vector.load %arg2[%c0, %c0_0] : memref<8x80xf32, #tpu.memory_space<vmem>>, vector<8x80xf32>
    %c0_1 = arith.constant 0 : index
    %c0_2 = arith.constant 0 : index
    %1 = vector.load %arg5[%c0_1, %c0_2] : memref<6x40xf32, #tpu.memory_space<vmem>>, vector<6x40xf32>
    %cst = arith.constant 0.000000e+00 : f32
    %2 = vector.broadcast %cst : f32 to vector<16x2xf32>
    %cst_3 = arith.constant 0.000000e+00 : f32
    %3 = vector.broadcast %cst_3 : f32 to vector<8x2xf32>
    %cst_4 = arith.constant 0.000000e+00 : f32
    %4 = vector.broadcast %cst_4 : f32 to vector<8x1xf32>
    %cst_5 = arith.constant 0.000000e+00 : f32
    %5 = vector.broadcast %cst_5 : f32 to vector<8x1xf32>
    %c0_6 = arith.constant 0 : index
    %c0_7 = arith.constant 0 : index
    %c0_8 = arith.constant 0 : index
    %6 = vector.load %arg1[%c0_6, %c0_7, %c0_8] : memref<2x16x42xf32, #tpu.memory_space<vmem>>, vector<1x16x42xf32>
    %7 = vector.shape_cast %6 : vector<1x16x42xf32> to vector<16x42xf32>
    %8 = tpu.concatenate %2, %7, %2 in 1 : vector<16x2xf32>, vector<16x42xf32>, vector<16x2xf32> -> vector<16x46xf32>
    %9 = vector.extract_strided_slice %8 {offsets = [0, 0], sizes = [16, 42], strides = [1, 1]} : vector<16x46xf32> to vector<16x42xf32>
    %10 = vector.extract_strided_slice %8 {offsets = [0, 1], sizes = [16, 42], strides = [1, 1]} : vector<16x46xf32> to vector<16x42xf32>
    %11 = vector.extract_strided_slice %8 {offsets = [0, 2], sizes = [16, 42], strides = [1, 1]} : vector<16x46xf32> to vector<16x42xf32>
    %12 = vector.extract_strided_slice %8 {offsets = [0, 3], sizes = [16, 42], strides = [1, 1]} : vector<16x46xf32> to vector<16x42xf32>
    %13 = vector.extract_strided_slice %8 {offsets = [0, 4], sizes = [16, 42], strides = [1, 1]} : vector<16x46xf32> to vector<16x42xf32>
    %14 = tpu.concatenate %9, %10, %11, %12, %13 in 0 : vector<16x42xf32>, vector<16x42xf32>, vector<16x42xf32>, vector<16x42xf32>, vector<16x42xf32> -> vector<80x42xf32>
    %cst_9 = arith.constant dense<0.000000e+00> : vector<8x42xf32>
    %15 = tpu.matmul %0, %14, %cst_9 {dimension_numbers = #tpu.dot_dimension_numbers<[1], [0], [0], [1], [0, 0, 1, 1], [], []>} : vector<8x80xf32>, vector<80x42xf32>, vector<8x42xf32> -> vector<8x42xf32>
    %cst_10 = arith.constant dense<0.000000e+00> : vector<8xf32>
    %16 = vector.multi_reduction <add>, %15, %cst_10 [1] : vector<8x42xf32> to vector<8xf32>
    %17 = vector.shape_cast %16 : vector<8xf32> to vector<8x1xf32>
    %18 = arith.addf %4, %17 : vector<8x1xf32>
    %19 = arith.mulf %15, %15 : vector<8x42xf32>
    %cst_11 = arith.constant dense<0.000000e+00> : vector<8xf32>
    %20 = vector.multi_reduction <add>, %19, %cst_11 [1] : vector<8x42xf32> to vector<8xf32>
    %21 = vector.shape_cast %20 : vector<8xf32> to vector<8x1xf32>
    %22 = arith.addf %5, %21 : vector<8x1xf32>
    %c1 = arith.constant 1 : index
    %c0_12 = arith.constant 0 : index
    %c0_13 = arith.constant 0 : index
    %23 = vector.load %arg1[%c1, %c0_12, %c0_13] : memref<2x16x42xf32, #tpu.memory_space<vmem>>, vector<1x16x42xf32>
    %24 = vector.shape_cast %23 : vector<1x16x42xf32> to vector<16x42xf32>
    %25 = tpu.concatenate %2, %24, %2 in 1 : vector<16x2xf32>, vector<16x42xf32>, vector<16x2xf32> -> vector<16x46xf32>
    %26 = vector.extract_strided_slice %25 {offsets = [0, 0], sizes = [16, 42], strides = [1, 1]} : vector<16x46xf32> to vector<16x42xf32>
    %27 = vector.extract_strided_slice %25 {offsets = [0, 1], sizes = [16, 42], strides = [1, 1]} : vector<16x46xf32> to vector<16x42xf32>
    %28 = vector.extract_strided_slice %25 {offsets = [0, 2], sizes = [16, 42], strides = [1, 1]} : vector<16x46xf32> to vector<16x42xf32>
    %29 = vector.extract_strided_slice %25 {offsets = [0, 3], sizes = [16, 42], strides = [1, 1]} : vector<16x46xf32> to vector<16x42xf32>
    %30 = vector.extract_strided_slice %25 {offsets = [0, 4], sizes = [16, 42], strides = [1, 1]} : vector<16x46xf32> to vector<16x42xf32>
    %31 = tpu.concatenate %26, %27, %28, %29, %30 in 0 : vector<16x42xf32>, vector<16x42xf32>, vector<16x42xf32>, vector<16x42xf32>, vector<16x42xf32> -> vector<80x42xf32>
    %cst_14 = arith.constant dense<0.000000e+00> : vector<8x42xf32>
    %32 = tpu.matmul %0, %31, %cst_14 {dimension_numbers = #tpu.dot_dimension_numbers<[1], [0], [0], [1], [0, 0, 1, 1], [], []>} : vector<8x80xf32>, vector<80x42xf32>, vector<8x42xf32> -> vector<8x42xf32>
    %cst_15 = arith.constant dense<0.000000e+00> : vector<8xf32>
    %33 = vector.multi_reduction <add>, %32, %cst_15 [1] : vector<8x42xf32> to vector<8xf32>
    %34 = vector.shape_cast %33 : vector<8xf32> to vector<8x1xf32>
    %35 = arith.addf %18, %34 : vector<8x1xf32>
    %36 = arith.mulf %32, %32 : vector<8x42xf32>
    %cst_16 = arith.constant dense<0.000000e+00> : vector<8xf32>
    %37 = vector.multi_reduction <add>, %36, %cst_16 [1] : vector<8x42xf32> to vector<8xf32>
    %38 = vector.shape_cast %37 : vector<8xf32> to vector<8x1xf32>
    %39 = arith.addf %22, %38 : vector<8x1xf32>
    %cst_17 = arith.constant 0.0119047621 : f32
    %40 = vector.broadcast %cst_17 : f32 to vector<8x1xf32>
    %41 = arith.mulf %35, %40 : vector<8x1xf32>
    %cst_18 = arith.constant 0.0119047621 : f32
    %42 = vector.broadcast %cst_18 : f32 to vector<8x1xf32>
    %43 = arith.mulf %39, %42 : vector<8x1xf32>
    %44 = arith.mulf %41, %41 : vector<8x1xf32>
    %45 = arith.subf %43, %44 : vector<8x1xf32>
    %c0_19 = arith.constant 0 : index
    %c0_20 = arith.constant 0 : index
    %46 = vector.load %arg3[%c0_19, %c0_20] : memref<8x1xf32, #tpu.memory_space<vmem>>, vector<8x1xf32>
    %cst_21 = arith.constant 9.99999974E-6 : f32
    %47 = vector.broadcast %cst_21 : f32 to vector<8x1xf32>
    %48 = arith.addf %45, %47 : vector<8x1xf32>
    %49 = math.rsqrt %48 : vector<8x1xf32>
    %50 = arith.mulf %46, %49 : vector<8x1xf32>
    %c0_22 = arith.constant 0 : index
    %c0_23 = arith.constant 0 : index
    %51 = vector.load %arg4[%c0_22, %c0_23] : memref<8x1xf32, #tpu.memory_space<vmem>>, vector<8x1xf32>
    %52 = arith.mulf %50, %41 : vector<8x1xf32>
    %53 = arith.subf %51, %52 : vector<8x1xf32>
    %cst_24 = arith.constant 0.000000e+00 : f32
    %54 = vector.broadcast %cst_24 : f32 to vector<6x1xf32>
    %cst_25 = arith.constant 0.000000e+00 : f32
    %55 = vector.broadcast %cst_25 : f32 to vector<6x1xf32>
    %56 = vector.broadcast %50 : vector<8x1xf32> to vector<8x42xf32>
    %57 = arith.mulf %56, %15 : vector<8x42xf32>
    %58 = vector.broadcast %53 : vector<8x1xf32> to vector<8x42xf32>
    %59 = arith.addf %57, %58 : vector<8x42xf32>
    %cst_26 = arith.constant 0.000000e+00 : f32
    %60 = vector.broadcast %cst_26 : f32 to vector<8x42xf32>
    %61 = arith.maximumf %59, %60 : vector<8x42xf32>
    %62 = tpu.concatenate %3, %61, %3 in 1 : vector<8x2xf32>, vector<8x42xf32>, vector<8x2xf32> -> vector<8x46xf32>
    %63 = vector.extract_strided_slice %62 {offsets = [0, 0], sizes = [8, 42], strides = [1, 1]} : vector<8x46xf32> to vector<8x42xf32>
    %64 = vector.extract_strided_slice %62 {offsets = [0, 1], sizes = [8, 42], strides = [1, 1]} : vector<8x46xf32> to vector<8x42xf32>
    %65 = vector.extract_strided_slice %62 {offsets = [0, 2], sizes = [8, 42], strides = [1, 1]} : vector<8x46xf32> to vector<8x42xf32>
    %66 = vector.extract_strided_slice %62 {offsets = [0, 3], sizes = [8, 42], strides = [1, 1]} : vector<8x46xf32> to vector<8x42xf32>
    %67 = vector.extract_strided_slice %62 {offsets = [0, 4], sizes = [8, 42], strides = [1, 1]} : vector<8x46xf32> to vector<8x42xf32>
    %68 = tpu.concatenate %63, %64, %65, %66, %67 in 0 : vector<8x42xf32>, vector<8x42xf32>, vector<8x42xf32>, vector<8x42xf32>, vector<8x42xf32> -> vector<40x42xf32>
    %cst_27 = arith.constant dense<0.000000e+00> : vector<6x42xf32>
    %69 = tpu.matmul %1, %68, %cst_27 {dimension_numbers = #tpu.dot_dimension_numbers<[1], [0], [0], [1], [0, 0, 1, 1], [], []>} : vector<6x40xf32>, vector<40x42xf32>, vector<6x42xf32> -> vector<6x42xf32>
    %cst_28 = arith.constant dense<0.000000e+00> : vector<6xf32>
    %70 = vector.multi_reduction <add>, %69, %cst_28 [1] : vector<6x42xf32> to vector<6xf32>
    %71 = vector.shape_cast %70 : vector<6xf32> to vector<6x1xf32>
    %72 = arith.addf %54, %71 : vector<6x1xf32>
    %73 = arith.mulf %69, %69 : vector<6x42xf32>
    %cst_29 = arith.constant dense<0.000000e+00> : vector<6xf32>
    %74 = vector.multi_reduction <add>, %73, %cst_29 [1] : vector<6x42xf32> to vector<6xf32>
    %75 = vector.shape_cast %74 : vector<6xf32> to vector<6x1xf32>
    %76 = arith.addf %55, %75 : vector<6x1xf32>
    %77 = vector.broadcast %50 : vector<8x1xf32> to vector<8x42xf32>
    %78 = arith.mulf %77, %32 : vector<8x42xf32>
    %79 = vector.broadcast %53 : vector<8x1xf32> to vector<8x42xf32>
    %80 = arith.addf %78, %79 : vector<8x42xf32>
    %cst_30 = arith.constant 0.000000e+00 : f32
    %81 = vector.broadcast %cst_30 : f32 to vector<8x42xf32>
    %82 = arith.maximumf %80, %81 : vector<8x42xf32>
    %83 = tpu.concatenate %3, %82, %3 in 1 : vector<8x2xf32>, vector<8x42xf32>, vector<8x2xf32> -> vector<8x46xf32>
    %84 = vector.extract_strided_slice %83 {offsets = [0, 0], sizes = [8, 42], strides = [1, 1]} : vector<8x46xf32> to vector<8x42xf32>
    %85 = vector.extract_strided_slice %83 {offsets = [0, 1], sizes = [8, 42], strides = [1, 1]} : vector<8x46xf32> to vector<8x42xf32>
    %86 = vector.extract_strided_slice %83 {offsets = [0, 2], sizes = [8, 42], strides = [1, 1]} : vector<8x46xf32> to vector<8x42xf32>
    %87 = vector.extract_strided_slice %83 {offsets = [0, 3], sizes = [8, 42], strides = [1, 1]} : vector<8x46xf32> to vector<8x42xf32>
    %88 = vector.extract_strided_slice %83 {offsets = [0, 4], sizes = [8, 42], strides = [1, 1]} : vector<8x46xf32> to vector<8x42xf32>
    %89 = tpu.concatenate %84, %85, %86, %87, %88 in 0 : vector<8x42xf32>, vector<8x42xf32>, vector<8x42xf32>, vector<8x42xf32>, vector<8x42xf32> -> vector<40x42xf32>
    %cst_31 = arith.constant dense<0.000000e+00> : vector<6x42xf32>
    %90 = tpu.matmul %1, %89, %cst_31 {dimension_numbers = #tpu.dot_dimension_numbers<[1], [0], [0], [1], [0, 0, 1, 1], [], []>} : vector<6x40xf32>, vector<40x42xf32>, vector<6x42xf32> -> vector<6x42xf32>
    %cst_32 = arith.constant dense<0.000000e+00> : vector<6xf32>
    %91 = vector.multi_reduction <add>, %90, %cst_32 [1] : vector<6x42xf32> to vector<6xf32>
    %92 = vector.shape_cast %91 : vector<6xf32> to vector<6x1xf32>
    %93 = arith.addf %72, %92 : vector<6x1xf32>
    %94 = arith.mulf %90, %90 : vector<6x42xf32>
    %cst_33 = arith.constant dense<0.000000e+00> : vector<6xf32>
    %95 = vector.multi_reduction <add>, %94, %cst_33 [1] : vector<6x42xf32> to vector<6xf32>
    %96 = vector.shape_cast %95 : vector<6xf32> to vector<6x1xf32>
    %97 = arith.addf %76, %96 : vector<6x1xf32>
    %cst_34 = arith.constant 0.0119047621 : f32
    %98 = vector.broadcast %cst_34 : f32 to vector<6x1xf32>
    %99 = arith.mulf %93, %98 : vector<6x1xf32>
    %cst_35 = arith.constant 0.0119047621 : f32
    %100 = vector.broadcast %cst_35 : f32 to vector<6x1xf32>
    %101 = arith.mulf %97, %100 : vector<6x1xf32>
    %102 = arith.mulf %99, %99 : vector<6x1xf32>
    %103 = arith.subf %101, %102 : vector<6x1xf32>
    %c0_36 = arith.constant 0 : index
    %c0_37 = arith.constant 0 : index
    %104 = vector.load %arg6[%c0_36, %c0_37] : memref<6x1xf32, #tpu.memory_space<vmem>>, vector<6x1xf32>
    %cst_38 = arith.constant 9.99999974E-6 : f32
    %105 = vector.broadcast %cst_38 : f32 to vector<6x1xf32>
    %106 = arith.addf %103, %105 : vector<6x1xf32>
    %107 = math.rsqrt %106 : vector<6x1xf32>
    %108 = arith.mulf %104, %107 : vector<6x1xf32>
    %c0_39 = arith.constant 0 : index
    %c0_40 = arith.constant 0 : index
    %109 = vector.load %arg7[%c0_39, %c0_40] : memref<6x1xf32, #tpu.memory_space<vmem>>, vector<6x1xf32>
    %110 = arith.mulf %108, %99 : vector<6x1xf32>
    %111 = arith.subf %109, %110 : vector<6x1xf32>
    %112 = vector.broadcast %108 : vector<6x1xf32> to vector<6x42xf32>
    %113 = arith.mulf %112, %69 : vector<6x42xf32>
    %114 = vector.broadcast %111 : vector<6x1xf32> to vector<6x42xf32>
    %115 = arith.addf %113, %114 : vector<6x42xf32>
    %cst_41 = arith.constant 0.000000e+00 : f32
    %116 = vector.broadcast %cst_41 : f32 to vector<6x42xf32>
    %117 = arith.maximumf %115, %116 : vector<6x42xf32>
    %c0_42 = arith.constant 0 : index
    %c0_43 = arith.constant 0 : index
    %c0_44 = arith.constant 0 : index
    %118 = vector.load %arg8[%c0_42, %c0_43, %c0_44] : memref<2x6x42xf32, #tpu.memory_space<vmem>>, vector<1x6x42xf32>
    %119 = vector.shape_cast %118 : vector<1x6x42xf32> to vector<6x42xf32>
    %120 = vector.shape_cast %117 : vector<6x42xf32> to vector<1x6x42xf32>
    tpu.vector_store %arg8[%c0_42, %c0_43, %c0_44], %120 {strides = array<i32>} : memref<2x6x42xf32, #tpu.memory_space<vmem>>, vector<1x6x42xf32>,
    %121 = vector.broadcast %108 : vector<6x1xf32> to vector<6x42xf32>
    %122 = arith.mulf %121, %90 : vector<6x42xf32>
    %123 = vector.broadcast %111 : vector<6x1xf32> to vector<6x42xf32>
    %124 = arith.addf %122, %123 : vector<6x42xf32>
    %cst_45 = arith.constant 0.000000e+00 : f32
    %125 = vector.broadcast %cst_45 : f32 to vector<6x42xf32>
    %126 = arith.maximumf %124, %125 : vector<6x42xf32>
    %c1_46 = arith.constant 1 : index
    %c0_47 = arith.constant 0 : index
    %c0_48 = arith.constant 0 : index
    %127 = vector.load %arg8[%c1_46, %c0_47, %c0_48] : memref<2x6x42xf32, #tpu.memory_space<vmem>>, vector<1x6x42xf32>
    %128 = vector.shape_cast %127 : vector<1x6x42xf32> to vector<6x42xf32>
    %129 = vector.shape_cast %126 : vector<6x42xf32> to vector<1x6x42xf32>
    tpu.vector_store %arg8[%c1_46, %c0_47, %c0_48], %129 {strides = array<i32>} : memref<2x6x42xf32, #tpu.memory_space<vmem>>, vector<1x6x42xf32>,
    return
  }
  func.func @transform_0(%arg0: i32) -> (i32, i32, i32) {
    %c0_i32 = arith.constant 0 : i32
    %c0_i32_0 = arith.constant 0 : i32
    %c0_i32_1 = arith.constant 0 : i32
    %c0_i32_2 = arith.constant 0 : i32
    return %c0_i32, %c0_i32_0, %c0_i32_1 : i32, i32, i32
  }
  func.func @transform_1(%arg0: i32) -> (i32, i32) {
    %c0_i32 = arith.constant 0 : i32
    %c0_i32_0 = arith.constant 0 : i32
    %c0_i32_1 = arith.constant 0 : i32
    return %c0_i32, %c0_i32_0 : i32, i32
  }
  func.func @transform_2(%arg0: i32) -> (i32, i32) {
    %c0_i32 = arith.constant 0 : i32
    %c0_i32_0 = arith.constant 0 : i32
    %c0_i32_1 = arith.constant 0 : i32
    return %c0_i32, %c0_i32_0 : i32, i32
  }
  func.func @transform_3(%arg0: i32) -> (i32, i32) {
    %c0_i32 = arith.constant 0 : i32
    %c0_i32_0 = arith.constant 0 : i32
    %c0_i32_1 = arith.constant 0 : i32
    return %c0_i32, %c0_i32_0 : i32, i32
  }
  func.func @transform_4(%arg0: i32) -> (i32, i32) {
    %c0_i32 = arith.constant 0 : i32
    %c0_i32_0 = arith.constant 0 : i32
    %c0_i32_1 = arith.constant 0 : i32
    return %c0_i32, %c0_i32_0 : i32, i32
  }
  func.func @transform_5(%arg0: i32) -> (i32, i32) {
    %c0_i32 = arith.constant 0 : i32
    %c0_i32_0 = arith.constant 0 : i32
    %c0_i32_1 = arith.constant 0 : i32
    return %c0_i32, %c0_i32_0 : i32, i32
  }
  func.func @transform_6(%arg0: i32) -> (i32, i32) {
    %c0_i32 = arith.constant 0 : i32
    %c0_i32_0 = arith.constant 0 : i32
    %c0_i32_1 = arith.constant 0 : i32
    return %c0_i32, %c0_i32_0 : i32, i32
  }
  func.func @transform_7(%arg0: i32) -> (i32, i32, i32) {
    %c0_i32 = arith.constant 0 : i32
    %c0_i32_0 = arith.constant 0 : i32
    %c0_i32_1 = arith.constant 0 : i32
    %c0_i32_2 = arith.constant 0 : i32
    return %c0_i32, %c0_i32_0, %c0_i32_1 : i32, i32, i32
  }
}

</mosaic_0001>

<llo_original>
// kernel: _lambda_.1
$region0: #{_lambda_.1}
  #allocation0 [shape = 'u32[]', space=smem, size = 0x4, offset = 0x4, fixed_abs, tag = 'smem constant byte address 0x4 - core index']
  #allocation1 [shape = 'u32[72,128]{1,0:T(1,128)}', space=vmem, size = 0x9000, scoped, tag = 'internal scratch']
  %s0 = inlined_call_operand.vmem [shape: f32[2,16,42], index: 0, kind: input, shape index: {}]
  %s1 = inlined_call_operand.vmem [shape: f32[8,80], index: 1, kind: input, shape index: {}]
  %s2 = inlined_call_operand.vmem [shape: f32[8,1], index: 2, kind: input, shape index: {}]
  %s3 = inlined_call_operand.vmem [shape: f32[8,1], index: 3, kind: input, shape index: {}]
  %s4 = inlined_call_operand.vmem [shape: f32[6,40], index: 4, kind: input, shape index: {}]
  %s5 = inlined_call_operand.vmem [shape: f32[6,1], index: 5, kind: input, shape index: {}]
  %s6 = inlined_call_operand.vmem [shape: f32[6,1], index: 6, kind: input, shape index: {}]
  %s7 = inlined_call_operand.vmem [shape: f32[2,6,42], index: 7, kind: output, shape index: {}]
  %s8 = sld [smem:[#allocation0]]
  $region38: #{_lambda_.1} parent=0
    _
  %s10 = ssub.s32 1, %s8
  %s11 = scalar_select 0, %s10, %s8
  // Predicated region
  $region2: #{_lambda_.1} parent=0 // pred_check
    _
  $region3: #{_lambda_.1} parent=0 // pred_check_branch
    %13 = sbr.rel (0) target = $region5
  $region4: #{_lambda_.1} parent=0 // pred_region
    _
  $region5: #{_lambda_.1} parent=0 // pred_fallthru
    _
  // Predicated region
  $region6: #{_lambda_.1} parent=0 // pred_check
    _
  $region7: #{_lambda_.1} parent=0 // pred_check_branch
    %15 = sbr.rel (0) target = $region9
  $region8: #{_lambda_.1} parent=0 // pred_region
    _
  $region9: #{_lambda_.1} parent=0 // pred_fallthru
    _
  // Predicated region
  $region10: #{_lambda_.1} parent=0 // pred_check
    _
  $region11: #{_lambda_.1} parent=0 // pred_check_branch
    %17 = sbr.rel (0) target = $region13
  $region12: #{_lambda_.1} parent=0 // pred_region
    _
  $region13: #{_lambda_.1} parent=0 // pred_fallthru
    _
  // Predicated region
  $region14: #{_lambda_.1} parent=0 // pred_check
    _
  $region15: #{_lambda_.1} parent=0 // pred_check_branch
    %19 = sbr.rel (0) target = $region17
  $region16: #{_lambda_.1} parent=0 // pred_region
    _
  $region17: #{_lambda_.1} parent=0 // pred_fallthru
    _
  // Predicated region
  $region18: #{_lambda_.1} parent=0 // pred_check
    _
  $region19: #{_lambda_.1} parent=0 // pred_check_branch
    %21 = sbr.rel (0) target = $region21
  $region20: #{_lambda_.1} parent=0 // pred_region
    _
  $region21: #{_lambda_.1} parent=0 // pred_fallthru
    _
  // Predicated region
  $region22: #{_lambda_.1} parent=0 // pred_check
    _
  $region23: #{_lambda_.1} parent=0 // pred_check_branch
    %23 = sbr.rel (0) target = $region25
  $region24: #{_lambda_.1} parent=0 // pred_region
    _
  $region25: #{_lambda_.1} parent=0 // pred_fallthru
    _
  // Predicated region
  $region26: #{_lambda_.1} parent=0 // pred_check
    _
  $region27: #{_lambda_.1} parent=0 // pred_check_branch
    %25 = sbr.rel (0) target = $region29
  $region28: #{_lambda_.1} parent=0 // pred_region
    _
  $region29: #{_lambda_.1} parent=0 // pred_fallthru
    _
  %v26 = vld [vmem:[%s1] sm:$0xff]
  %v27 = vld [vmem:[%s4] sm:$0x3f]
  %v28 = vld [vmem:[%s0] sm:$0xff]
  %v29 = vld [vmem:[%s0 + $0x8] sm:$0xff]
  %32 = vrot.lane.b32.xlu0 %v28, 2
  %v33 = vpop.permute.xlu0 %32
  %34 = vrot.lane.b32.xlu0 %v29, 2
  %v35 = vpop.permute.xlu0 %34
  %vm38 = vcmask 15360
  %v39 = vsel %vm38, 0.0, %v33
  %v40 = vsel %vm38, 0.0, %v35
  %vm41 = vcmask 359424
  %v42 = vsel %vm41, %v39, 0.0
  %v43 = vsel %vm41, %v40, 0.0
  %46 = vrot.lane.b32.xlu0 %v42, 127
  %v47 = vpop.permute.xlu0 %46
  %48 = vrot.lane.b32.xlu0 %v43, 127
  %v49 = vpop.permute.xlu0 %48
  %52 = vrot.lane.b32.xlu0 %v42, 126
  %v53 = vpop.permute.xlu0 %52
  %54 = vrot.lane.b32.xlu0 %v43, 126
  %v55 = vpop.permute.xlu0 %54
  %58 = vrot.lane.b32.xlu0 %v42, 125
  %v59 = vpop.permute.xlu0 %58
  %60 = vrot.lane.b32.xlu0 %v43, 125
  %v61 = vpop.permute.xlu0 %60
  %64 = vrot.lane.b32.xlu0 %v42, 124
  %v65 = vpop.permute.xlu0 %64
  %66 = vrot.lane.b32.xlu0 %v43, 124
  %v67 = vpop.permute.xlu0 %66
  %vm70 = vcmask 654336
  %v72 = vsel %vm70, %v26, 0
  %74 = vmatpush.msra.mxu0 0.0
  %75 = vmatpush.msra.mxu0 0.0
  %76 = vmatpush.msra.mxu0 0.0
  %77 = vmatpush.msra.mxu0 0.0
  %78 = vmatpush.msra.mxu0 0.0
  %79 = vmatpush.msra.mxu0 0.0
  %80 = vmatpush.msra.mxu0 %v67
  %81 = vmatpush.msra.mxu0 %v65
  %82 = vmatpush.msra.mxu0 %v61
  %83 = vmatpush.msra.mxu0 %v59
  %84 = vmatpush.msra.mxu0 %v55
  %85 = vmatpush.msra.mxu0 %v53
  %86 = vmatpush.msra.mxu0 %v49
  %87 = vmatpush.msra.mxu0 %v47
  %88 = vmatpush.msra.mxu0 %v43
  %89 = vmatpush.msra.mxu0 %v42
  %90 = vmatmul.f32.gmra.mxu0 %v72
  %v91 = vpop.f32.mrf.mxu0
  %v92 = vadd.f32 0.0, %v91
  %93 = vdwg.mxu0
  %vm94 = vcmask 343040
  %v95 = vsel %vm94, %v92, 0.0
  %96 = vadd.xlane.f32.xlu0 %v95
  %v97 = vpop.xlane.xlu0 %96
  %v98 = vadd.f32 %v97, 0.0
  %v99 = vmul.f32 %v92, %v92
  %v100 = vsel %vm94, %v99, 0.0
  %101 = vadd.xlane.f32.xlu0 %v100
  %v102 = vpop.xlane.xlu0 %101
  %v103 = vadd.f32 %v102, 0.0
  %s104 = scalar_lea.vmem %s0, 16
  %v105 = vld [vmem:[%s104] sm:$0xff]
  %v106 = vld [vmem:[%s104 + $0x8] sm:$0xff]
  %109 = vrot.lane.b32.xlu0 %v105, 2
  %v110 = vpop.permute.xlu0 %109
  %111 = vrot.lane.b32.xlu0 %v106, 2
  %v112 = vpop.permute.xlu0 %111
  %v115 = vsel %vm38, 0.0, %v110
  %v116 = vsel %vm38, 0.0, %v112
  %v117 = vsel %vm41, %v115, 0.0
  %v118 = vsel %vm41, %v116, 0.0
  %121 = vrot.lane.b32.xlu0 %v117, 127
  %v122 = vpop.permute.xlu0 %121
  %123 = vrot.lane.b32.xlu0 %v118, 127
  %v124 = vpop.permute.xlu0 %123
  %127 = vrot.lane.b32.xlu0 %v117, 126
  %v128 = vpop.permute.xlu0 %127
  %129 = vrot.lane.b32.xlu0 %v118, 126
  %v130 = vpop.permute.xlu0 %129
  %133 = vrot.lane.b32.xlu0 %v117, 125
  %v134 = vpop.permute.xlu0 %133
  %135 = vrot.lane.b32.xlu0 %v118, 125
  %v136 = vpop.permute.xlu0 %135
  %139 = vrot.lane.b32.xlu0 %v117, 124
  %v140 = vpop.permute.xlu0 %139
  %141 = vrot.lane.b32.xlu0 %v118, 124
  %v142 = vpop.permute.xlu0 %141
  %145 = vmatpush.msra.mxu0 0.0
  %146 = vmatpush.msra.mxu0 0.0
  %147 = vmatpush.msra.mxu0 0.0
  %148 = vmatpush.msra.mxu0 0.0
  %149 = vmatpush.msra.mxu0 0.0
  %150 = vmatpush.msra.mxu0 0.0
  %151 = vmatpush.msra.mxu0 %v142
  %152 = vmatpush.msra.mxu0 %v140
  %153 = vmatpush.msra.mxu0 %v136
  %154 = vmatpush.msra.mxu0 %v134
  %155 = vmatpush.msra.mxu0 %v130
  %156 = vmatpush.msra.mxu0 %v128
  %157 = vmatpush.msra.mxu0 %v124
  %158 = vmatpush.msra.mxu0 %v122
  %159 = vmatpush.msra.mxu0 %v118
  %160 = vmatpush.msra.mxu0 %v117
  %161 = vmatmul.f32.gmra.mxu0 %v72
  %v162 = vpop.f32.mrf.mxu0
  %v163 = vadd.f32 0.0, %v162
  %164 = vdwg.mxu0
  %v165 = vsel %vm94, %v163, 0.0
  %166 = vadd.xlane.f32.xlu0 %v165
  %v167 = vpop.xlane.xlu0 %166
  %v168 = vadd.f32 %v98, %v167
  %v169 = vmul.f32 %v163, %v163
  %v170 = vsel %vm94, %v169, 0.0
  %171 = vadd.xlane.f32.xlu0 %v170
  %v172 = vpop.xlane.xlu0 %171
  %v173 = vadd.f32 %v103, %v172
  %v174 = vmul.f32 %v168, 0.011904762
  %v175 = vmul.f32 %v173, 0.011904762
  %v176 = vmul.f32 %v174, %v174
  %v177 = vsub.f32 %v175, %v176
  %v178 = vld [vmem:[%s2] sm:$0xff]
  %v179 = vadd.f32 %v177, 1e-05
  %v180 = vrsqrt.pop %v179
  %v181 = vmul.f32 %v180, %v179
  %v182 = vmul.f32 %v181, %v180
  %v183 = vmul.f32 0.5, %v182
  %v184 = vsub.f32 1.5, %v183
  %v185 = vmul.f32 %v180, %v184
  %vm186 = vweird.f32 %v179
  %vm187 = vweird.f32 %v180
  %vm188 = vmor %vm186, %vm187
  %v189 = vsel %vm188, %v180, %v185
  %v190 = vmul.f32 %v178, %v189
  %v191 = vld [vmem:[%s3] sm:$0xff]
  %v192 = vmul.f32 %v190, %v174
  %v193 = vsub.f32 %v191, %v192
  %195 = vset.pattern.permute.xlu0 0
  %196 = vperm.xlu0 %195, %v190
  %v197 = vpop.permute.xlu0 %196
  %v199 = vmul.f32 %v197, %v92
  %201 = vset.pattern.permute.xlu0 0
  %202 = vperm.xlu0 %201, %v193
  %v203 = vpop.permute.xlu0 %202
  %v205 = vadd.f32 %v199, %v203
  %v206 = vmax.f32 %v205, 0.0
  %208 = vrot.lane.b32.xlu0 %v206, 2
  %v209 = vpop.permute.xlu0 %208
  %v211 = vsel %vm38, 0.0, %v209
  %v212 = vsel %vm41, %v211, 0.0
  %214 = vrot.lane.b32.xlu0 %v212, 127
  %v215 = vpop.permute.xlu0 %214
  %217 = vrot.lane.b32.xlu0 %v212, 126
  %v218 = vpop.permute.xlu0 %217
  %220 = vrot.lane.b32.xlu0 %v212, 125
  %v221 = vpop.permute.xlu0 %220
  %223 = vrot.lane.b32.xlu0 %v212, 124
  %v224 = vpop.permute.xlu0 %223
  %vm226 = vcmask 326656
  %v228 = vsel %vm226, %v27, 0
  %230 = vmatpush.msra.mxu0 0.0
  %231 = vmatpush.msra.mxu0 0.0
  %232 = vmatpush.msra.mxu0 0.0
  %233 = vmatpush.msra.mxu0 0.0
  %234 = vmatpush.msra.mxu0 0.0
  %235 = vmatpush.msra.mxu0 0.0
  %236 = vmatpush.msra.mxu0 0.0
  %237 = vmatpush.msra.mxu0 0.0
  %238 = vmatpush.msra.mxu0 0.0
  %239 = vmatpush.msra.mxu0 0.0
  %240 = vmatpush.msra.mxu0 0.0
  %241 = vmatpush.msra.mxu0 %v224
  %242 = vmatpush.msra.mxu0 %v221
  %243 = vmatpush.msra.mxu0 %v218
  %244 = vmatpush.msra.mxu0 %v215
  %245 = vmatpush.msra.mxu0 %v212
  %246 = vmatmul.f32.gmra.mxu0 %v228
  %v247 = vpop.f32.mrf.mxu0
  %v248 = vadd.f32 0.0, %v247
  %249 = vdwg.mxu0
  %vm250 = vcmask 340992
  %v251 = vsel %vm250, %v248, 0.0
  %252 = vadd.xlane.f32.xlu0 %v251
  %v253 = vpop.xlane.xlu0 %252
  %v254 = vadd.f32 %v253, 0.0
  %v255 = vmul.f32 %v248, %v248
  %v256 = vsel %vm250, %v255, 0.0
  %257 = vadd.xlane.f32.xlu0 %v256
  %v258 = vpop.xlane.xlu0 %257
  %v259 = vadd.f32 %v258, 0.0
  %v260 = vmul.f32 %v197, %v163
  %v261 = vadd.f32 %v260, %v203
  %v262 = vmax.f32 %v261, 0.0
  %264 = vrot.lane.b32.xlu0 %v262, 2
  %v265 = vpop.permute.xlu0 %264
  %v267 = vsel %vm38, 0.0, %v265
  %v268 = vsel %vm41, %v267, 0.0
  %270 = vrot.lane.b32.xlu0 %v268, 127
  %v271 = vpop.permute.xlu0 %270
  %273 = vrot.lane.b32.xlu0 %v268, 126
  %v274 = vpop.permute.xlu0 %273
  %276 = vrot.lane.b32.xlu0 %v268, 125
  %v277 = vpop.permute.xlu0 %276
  %279 = vrot.lane.b32.xlu0 %v268, 124
  %v280 = vpop.permute.xlu0 %279
  %282 = vmatpush.msra.mxu0 0.0
  %283 = vmatpush.msra.mxu0 0.0
  %284 = vmatpush.msra.mxu0 0.0
  %285 = vmatpush.msra.mxu0 0.0
  %286 = vmatpush.msra.mxu0 0.0
  %287 = vmatpush.msra.mxu0 0.0
  %288 = vmatpush.msra.mxu0 0.0
  %289 = vmatpush.msra.mxu0 0.0
  %290 = vmatpush.msra.mxu0 0.0
  %291 = vmatpush.msra.mxu0 0.0
  %292 = vmatpush.msra.mxu0 0.0
  %293 = vmatpush.msra.mxu0 %v280
  %294 = vmatpush.msra.mxu0 %v277
  %295 = vmatpush.msra.mxu0 %v274
  %296 = vmatpush.msra.mxu0 %v271
  %297 = vmatpush.msra.mxu0 %v268
  %298 = vmatmul.f32.gmra.mxu0 %v228
  %v299 = vpop.f32.mrf.mxu0
  %v300 = vadd.f32 0.0, %v299
  %301 = vdwg.mxu0
  %v302 = vsel %vm250, %v300, 0.0
  %303 = vadd.xlane.f32.xlu0 %v302
  %v304 = vpop.xlane.xlu0 %303
  %v305 = vadd.f32 %v254, %v304
  %v306 = vmul.f32 %v300, %v300
  %v307 = vsel %vm250, %v306, 0.0
  %308 = vadd.xlane.f32.xlu0 %v307
  %v309 = vpop.xlane.xlu0 %308
  %v310 = vadd.f32 %v259, %v309
  %v311 = vmul.f32 %v305, 0.011904762
  %v312 = vmul.f32 %v310, 0.011904762
  %v313 = vmul.f32 %v311, %v311
  %v314 = vsub.f32 %v312, %v313
  %v315 = vld [vmem:[%s5] sm:$0x3f]
  %v316 = vadd.f32 %v314, 1e-05
  %v317 = vrsqrt.pop %v316
  %v318 = vmul.f32 %v317, %v316
  %v319 = vmul.f32 %v318, %v317
  %v320 = vmul.f32 0.5, %v319
  %v321 = vsub.f32 1.5, %v320
  %v322 = vmul.f32 %v317, %v321
  %vm323 = vweird.f32 %v316
  %vm324 = vweird.f32 %v317
  %vm325 = vmor %vm323, %vm324
  %v326 = vsel %vm325, %v317, %v322
  %v327 = vmul.f32 %v315, %v326
  %v328 = vld [vmem:[%s6] sm:$0x3f]
  %v329 = vmul.f32 %v327, %v311
  %v330 = vsub.f32 %v328, %v329
  %332 = vset.pattern.permute.xlu0 0
  %333 = vperm.xlu0 %332, %v327
  %v334 = vpop.permute.xlu0 %333
  %v336 = vmul.f32 %v334, %v248
  %338 = vset.pattern.permute.xlu0 0
  %339 = vperm.xlu0 %338, %v330
  %v340 = vpop.permute.xlu0 %339
  %v342 = vadd.f32 %v336, %v340
  %v343 = vmax.f32 %v342, 0.0
  %344 = vst.msk [vmem:[%s7] sm:$0x3f] %vm250, %v343
  %v345 = vmul.f32 %v334, %v300
  %v346 = vadd.f32 %v345, %v340
  %v347 = vmax.f32 %v346, 0.0
  %s348 = scalar_lea.vmem %s7, 8
  %349 = vst.msk [vmem:[%s348] sm:$0x3f] %vm250, %v347
  // Predicated region
  $region30: #{_lambda_.1} parent=0 // pred_check
    _
  $region31: #{_lambda_.1} parent=0 // pred_check_branch
    %351 = sbr.rel (0) target = $region33
  $region32: #{_lambda_.1} parent=0 // pred_region
    _
  $region33: #{_lambda_.1} parent=0 // pred_fallthru
    _
  // Predicated region
  $region34: #{_lambda_.1} parent=0 // pred_check
    _
  $region35: #{_lambda_.1} parent=0 // pred_check_branch
    %353 = sbr.rel (0) target = $region37
  $region36: #{_lambda_.1} parent=0 // pred_region
    _
  $region37: #{_lambda_.1} parent=0 // pred_fallthru
    _

</llo_original>
